<compile_context>
chip_gen: v5e
topology: v5e:2x2
jax: 0.10.0
libtpu: 0.0.40
codegen_flags: <defaults>
</compile_context>

<pallas_src>
import functools
import math

import jax
import jax.numpy as jnp
from jax import lax
from jax.experimental import pallas as pl
from jax.experimental.pallas import tpu as pltpu


def _make_pe_table(max_len: int, d_model: int) -> jnp.ndarray:
    """Deterministic positional-encoding buffer, shape (max_len, 1, d_model)."""
    pos = jnp.arange(max_len, dtype=jnp.float32)[:, None]                  # (max_len, 1)
    div = jnp.exp(jnp.arange(0, d_model, 2, dtype=jnp.float32)
                  * (-math.log(10000.0) / d_model))                        # (d_model/2,)
    pe = jnp.zeros((max_len, d_model), jnp.float32)
    pe = pe.at[:, 0::2].set(jnp.sin(pos * div))
    pe = pe.at[:, 1::2].set(jnp.cos(pos * div))
    return pe[:, None, :]                                                  # (max_len, 1, d_model)


def _hash_u32(x):
    """SplitMix32-style avalanche finalizer on uint32 (pure VPU int ops)."""
    x = x ^ (x >> 16)
    x = x * jnp.uint32(0x7FEB352D)
    x = x ^ (x >> 15)
    x = x * jnp.uint32(0x846CA68B)
    x = x ^ (x >> 16)
    return x


def _pe_dropout_kernel(seed_ref, x_ref, pe_ref, o_ref, *, p: float, training: bool):
    """seed_ref: (1,) SMEM; x_ref/o_ref: (s_blk, B, D) VMEM; pe_ref: (s_blk, 1, D) VMEM."""
    x = x_ref[...]                  # (s_blk, B, D), x.dtype — no f32 upcast
    pe = pe_ref[...]                # (s_blk, 1, D), x.dtype
    y = x + pe                      # broadcast over the batch (sublane) axis

    if training and p > 0.0:
        if p >= 1.0:
            y = jnp.zeros_like(y)
        else:
            s_blk, b, d = y.shape
            # Global flat element index (unique across tiles) as the PRNG counter.
            i0 = lax.broadcasted_iota(jnp.int32, y.shape, 0).astype(jnp.uint32)
            i1 = lax.broadcasted_iota(jnp.int32, y.shape, 1).astype(jnp.uint32)
            i2 = lax.broadcasted_iota(jnp.int32, y.shape, 2).astype(jnp.uint32)
            tile_off = pl.program_id(0).astype(jnp.uint32) * jnp.uint32(s_blk * b * d)
            flat = tile_off + i0 * jnp.uint32(b * d) + i1 * jnp.uint32(d) + i2
            seed_mix = (seed_ref[0].astype(jnp.uint32) + jnp.uint32(1)) * jnp.uint32(0x9E3779B9)
            bits = _hash_u32(flat ^ seed_mix)                              # uniform uint32
            # Inverted dropout via unsigned threshold: drop iff bits < p * 2^32.
            thresh = jnp.uint32(min(int(round(p * 2.0 ** 32)), 2 ** 32 - 1))
            keep = bits >= thresh
            scale = jnp.asarray(1.0 / (1.0 - p), dtype=y.dtype)
            y = jnp.where(keep, y * scale, jnp.zeros_like(y))

    o_ref[...] = y.astype(o_ref.dtype)


def positional_encoding_forward(x, pe, *, p=0.1, training=False, seed=0,
                                target_block_bytes=1 << 20):
    """x: (S, B, D); pe: (max_len, 1, D) buffer. Returns dropout(x + pe[:S])."""
    S, B, D = x.shape
    pe_s = pe[:S].astype(x.dtype)                                          # (S, 1, D)

    # Sequence-axis tile sized to ~1 MiB of x per block: big enough to pipeline,
    # small enough for v5e/v6e/v7x default scoped-VMEM (with double buffering).
    itemsize = jnp.dtype(x.dtype).itemsize
    rows = max(1, int(target_block_bytes // max(1, B * D * itemsize)))
    if rows >= S:
        s_blk = S
    else:
        s_blk = min(S, max(8, (rows // 8) * 8))
    grid = (pl.cdiv(S, s_blk),)

    kernel = functools.partial(_pe_dropout_kernel, p=float(p), training=bool(training))

    return pl.pallas_call(
        kernel,
        out_shape=jax.ShapeDtypeStruct((S, B, D), x.dtype),
        grid=grid,
        in_specs=[
            pl.BlockSpec(memory_space=pltpu.MemorySpace.SMEM),             # seed scalar
            pl.BlockSpec((s_blk, B, D), lambda i: (i, 0, 0)),              # x tile
            pl.BlockSpec((s_blk, 1, D), lambda i: (i, 0, 0)),              # pe tile
        ],
        out_specs=pl.BlockSpec((s_blk, B, D), lambda i: (i, 0, 0)),
        compiler_params=pltpu.CompilerParams(
            dimension_semantics=("parallel",)),                            # 2 TCs on v7x
    )(jnp.asarray([seed], jnp.int32), x, pe_s)


if __name__ == "__main__":
    # Small shapes consistent with the module's forward: (seq, batch, d_model).
    S, B, D = 8, 2, 32
    MAX_LEN = 64

    key = jax.random.PRNGKey(0)
    x = jax.random.normal(key, (S, B, D), dtype=jnp.float32)
    pe = _make_pe_table(MAX_LEN, D)

    # Eval mode (dropout = identity) -> deterministic, check against reference.
    out_eval = positional_encoding_forward(x, pe, p=0.1, training=False)
    out_eval = jax.block_until_ready(out_eval)
    ref = x + pe[:S]                                                       # (S,1,D) broadcasts over B
    assert out_eval.shape == (S, B, D)
    assert jnp.allclose(out_eval, ref, atol=1e-6, rtol=1e-6), "eval mismatch vs reference"

    # Train mode: in-kernel dropout (stochastic). Every output element must be
    # either 0 (dropped) or (x+pe)/(1-p) (kept).
    p = 0.1
    out_train = positional_encoding_forward(x, pe, p=p, training=True, seed=1234)
    out_train = jax.block_until_ready(out_train)
    scaled = ref / (1.0 - p)
    ok = jnp.isclose(out_train, 0.0, atol=1e-6) | jnp.isclose(out_train, scaled, atol=1e-5, rtol=1e-5)
    assert bool(jnp.all(ok)), "train-mode values are neither dropped nor correctly scaled"

    print("KERNEL_OK")
</pallas_src>

<mosaic_0001>
module attributes {stable_mosaic.version = 11 : i64} {
  func.func @_pe_dropout_kernel(%arg0: i32, %arg1: memref<1xi32, #tpu.memory_space<smem>>, %arg2: memref<8x2x32xf32, #tpu.memory_space<vmem>>, %arg3: memref<8x1x32xf32, #tpu.memory_space<vmem>>, %arg4: memref<8x2x32xf32, #tpu.memory_space<vmem>>) attributes {dimension_semantics = [#tpu.dimension_semantics<parallel>], iteration_bounds = array<i64: 1>, scalar_prefetch = 0 : i64, scratch_operands = 0 : i64, tpu.core_type = #tpu.core_type<tc>, window_params = [{transform_indices = @transform_0, window_bounds = array<i64: 1>}, {transform_indices = @transform_1, window_bounds = array<i64: 8, 2, 32>}, {transform_indices = @transform_2, window_bounds = array<i64: 8, 1, 32>}, {transform_indices = @transform_3, window_bounds = array<i64: 8, 2, 32>}]} {
    %c0 = arith.constant 0 : index
    %c0_0 = arith.constant 0 : index
    %c0_1 = arith.constant 0 : index
    %0 = vector.load %arg2[%c0, %c0_0, %c0_1] : memref<8x2x32xf32, #tpu.memory_space<vmem>>, vector<8x2x32xf32>
    %c0_2 = arith.constant 0 : index
    %c0_3 = arith.constant 0 : index
    %c0_4 = arith.constant 0 : index
    %1 = vector.load %arg3[%c0_2, %c0_3, %c0_4] : memref<8x1x32xf32, #tpu.memory_space<vmem>>, vector<8x1x32xf32>
    %2 = vector.broadcast %1 : vector<8x1x32xf32> to vector<8x2x32xf32>
    %3 = arith.addf %0, %2 : vector<8x2x32xf32>
    %c0_5 = arith.constant 0 : index
    %c0_6 = arith.constant 0 : index
    %c0_7 = arith.constant 0 : index
    %4 = vector.load %arg4[%c0_5, %c0_6, %c0_7] : memref<8x2x32xf32, #tpu.memory_space<vmem>>, vector<8x2x32xf32>
    tpu.vector_store %arg4[%c0_5, %c0_6, %c0_7], %3 {strides = array<i32>} : memref<8x2x32xf32, #tpu.memory_space<vmem>>, vector<8x2x32xf32>,
    return
  }
  func.func @transform_0(%arg0: i32) -> i32 {
    %c0_i32 = arith.constant 0 : i32
    %c0_i32_0 = arith.constant 0 : i32
    return %c0_i32 : i32
  }
  func.func @transform_1(%arg0: i32) -> (i32, i32, i32) {
    %c0_i32 = arith.constant 0 : i32
    %c0_i32_0 = arith.constant 0 : i32
    %c0_i32_1 = arith.constant 0 : i32
    return %arg0, %c0_i32, %c0_i32_0 : i32, i32, i32
  }
  func.func @transform_2(%arg0: i32) -> (i32, i32, i32) {
    %c0_i32 = arith.constant 0 : i32
    %c0_i32_0 = arith.constant 0 : i32
    %c0_i32_1 = arith.constant 0 : i32
    return %arg0, %c0_i32, %c0_i32_0 : i32, i32, i32
  }
  func.func @transform_3(%arg0: i32) -> (i32, i32, i32) {
    %c0_i32 = arith.constant 0 : i32
    %c0_i32_0 = arith.constant 0 : i32
    %c0_i32_1 = arith.constant 0 : i32
    return %arg0, %c0_i32, %c0_i32_0 : i32, i32, i32
  }
}

</mosaic_0001>

<llo_original>
// kernel: tpu_custom_call.1
$region0: #{tpu_custom_call.1}
  #allocation0 [shape = 'u32[]', space=smem, size = 0x4, offset = 0x4, fixed_abs, tag = 'smem constant byte address 0x4 - core index']
  #allocation1 [shape = 'u32[72,128]{1,0:T(1,128)}', space=vmem, size = 0x9000, scoped, tag = 'internal scratch']
  #allocation2 [shape = 's32[1]{0:T(128)S(6)}', space=smem, size = 0x200, scoped, tag = 'scoped memory for tpu_custom_call.1']
  %s0 = inlined_call_operand.<no memory space> [shape: s32[1], index: 0, kind: input, shape index: {}]
  %s1 = inlined_call_operand.hbm [shape: f32[8,2,32], index: 1, kind: input, shape index: {}]
  %s2 = inlined_call_operand.hbm [shape: f32[8,1,32], index: 2, kind: input, shape index: {}]
  %s3 = inlined_call_operand.hbm [shape: f32[8,2,32], index: 3, kind: output, shape index: {}]
  %s4 = sld [smem:[#allocation0]]
  $region30: #{tpu_custom_call.1} parent=0
    _
  %s6 = ssub.s32 1, %s4
  %s7 = scalar_select 0, %s6, %s4
  %8 = sst [smem:[#allocation2]] %s0
  $region1: #{tpu_custom_call.1} parent=0
    #allocation3 [shape = 'u8[8192]{0}', space=vmem, size = 0x2000, scoped, tag = 'input window, operand 1, single buffered']
    #allocation4 [shape = 's32[1]{0}', space=sflag, size = 0x4, scoped, tag = 'scoped memory for tpu_custom_call.1']
    #allocation5 [shape = 's32[1]{0}', space=sflag, size = 0x4, scoped, tag = 'scoped memory for tpu_custom_call.1']
    #allocation6 [shape = 'u8[4096]{0}', space=vmem, size = 0x1000, scoped, tag = 'input window, operand 2, single buffered']
    #allocation7 [shape = 's32[1]{0}', space=sflag, size = 0x4, scoped, tag = 'scoped memory for tpu_custom_call.1']
    #allocation8 [shape = 'u8[8192]{0}', space=vmem, size = 0x2000, scoped, tag = 'output window, operand 0, single buffered']
    %9 = vsyncpa [#allocation4], 0
    %10 = vsyncpa [#allocation7], 0
    %11 = vsyncpa [#allocation5], 0
    // Predicated region
    $region2: #{tpu_custom_call.1} parent=1 // pred_check
      _
    $region3: #{tpu_custom_call.1} parent=1 // pred_check_branch
      %13 = sbr.rel (0) target = $region5
    $region4: #{tpu_custom_call.1} parent=1 // pred_region
      _
    $region5: #{tpu_custom_call.1} parent=1 // pred_fallthru
      _
    // Predicated region
    $region6: #{tpu_custom_call.1} parent=1 // pred_check
      _
    $region7: #{tpu_custom_call.1} parent=1 // pred_check_branch
      %15 = sbr.rel (0) target = $region9
    $region8: #{tpu_custom_call.1} parent=1 // pred_region
      %17 = vsyncadd [#allocation4], 0
      %s18 = sshll.u32 %s1, 4
      %s19 = int_to_ptr.hbm [resolvable:$true] %s18
      %s20 = sshll.u32 [#allocation3], 4
      %s21 = int_to_ptr.vmem [resolvable:$true] %s20
      %26 = dma.hbm_to_vmem [thread:$0]  %s19, 256, %s21, [#allocation4], 32, 32, 2
    $region9: #{tpu_custom_call.1} parent=1 // pred_fallthru
      _
    // Predicated region
    $region10: #{tpu_custom_call.1} parent=1 // pred_check
      _
    $region11: #{tpu_custom_call.1} parent=1 // pred_check_branch
      %28 = sbr.rel (0) target = $region13
    $region12: #{tpu_custom_call.1} parent=1 // pred_region
      %30 = vsyncadd [#allocation7], 0
      %s31 = sshll.u32 %s2, 4
      %s32 = int_to_ptr.hbm [resolvable:$true] %s31
      %s33 = sshll.u32 [#allocation6], 4
      %s34 = int_to_ptr.vmem [resolvable:$true] %s33
      %39 = dma.hbm_to_vmem [thread:$0]  %s32, 128, %s34, [#allocation7], 16, 16, 1
    $region13: #{tpu_custom_call.1} parent=1 // pred_fallthru
      _
    // Predicated region
    $region14: #{tpu_custom_call.1} parent=1 // pred_check
      _
    $region15: #{tpu_custom_call.1} parent=1 // pred_check_branch
      %41 = sbr.rel (0) target = $region17
    $region16: #{tpu_custom_call.1} parent=1 // pred_region
      %43 = dma.done [#allocation4], 256
    $region17: #{tpu_custom_call.1} parent=1 // pred_fallthru
      _
    // Predicated region
    $region18: #{tpu_custom_call.1} parent=1 // pred_check
      _
    $region19: #{tpu_custom_call.1} parent=1 // pred_check_branch
      %45 = sbr.rel (0) target = $region21
    $region20: #{tpu_custom_call.1} parent=1 // pred_region
      %47 = dma.done [#allocation7], 128
    $region21: #{tpu_custom_call.1} parent=1 // pred_fallthru
      _
    %v48 = vld [vmem:[#allocation3] sm:$0x3]
    %v49 = vld [vmem:[#allocation3 + $0x2] sm:$0x3]
    %v50 = vld [vmem:[#allocation3 + $0x4] sm:$0x3]
    %v51 = vld [vmem:[#allocation3 + $0x6] sm:$0x3]
    %v52 = vld [vmem:[#allocation3 + $0x8] sm:$0x3]
    %v53 = vld [vmem:[#allocation3 + $0xa] sm:$0x3]
    %v54 = vld [vmem:[#allocation3 + $0xc] sm:$0x3]
    %v55 = vld [vmem:[#allocation3 + $0xe] sm:$0x3]
    %v56 = vld [vmem:[#allocation6] sm:$0x1]
    %v57 = vld [vmem:[#allocation6 + $0x1] sm:$0x1]
    %v58 = vld [vmem:[#allocation6 + $0x2] sm:$0x1]
    %v59 = vld [vmem:[#allocation6 + $0x3] sm:$0x1]
    %v60 = vld [vmem:[#allocation6 + $0x4] sm:$0x1]
    %v61 = vld [vmem:[#allocation6 + $0x5] sm:$0x1]
    %v62 = vld [vmem:[#allocation6 + $0x6] sm:$0x1]
    %v63 = vld [vmem:[#allocation6 + $0x7] sm:$0x1]
    %v72 = vperm.slane %v56, 0
    %v73 = vperm.slane %v57, 0
    %v74 = vperm.slane %v58, 0
    %v75 = vperm.slane %v59, 0
    %v76 = vperm.slane %v60, 0
    %v77 = vperm.slane %v61, 0
    %v78 = vperm.slane %v62, 0
    %v79 = vperm.slane %v63, 0
    %v88 = vadd.f32 %v48, %v72
    %v89 = vadd.f32 %v49, %v73
    %v90 = vadd.f32 %v50, %v74
    %v91 = vadd.f32 %v51, %v75
    %v92 = vadd.f32 %v52, %v76
    %v93 = vadd.f32 %v53, %v77
    %v94 = vadd.f32 %v54, %v78
    %v95 = vadd.f32 %v55, %v79
    %vm96 = vcmask 254976
    %97 = vst.msk [vmem:[#allocation8] sm:$0x3] %vm96, %v88
    %98 = vst.msk [vmem:[#allocation8 + $0x2] sm:$0x3] %vm96, %v89
    %99 = vst.msk [vmem:[#allocation8 + $0x4] sm:$0x3] %vm96, %v90
    %100 = vst.msk [vmem:[#allocation8 + $0x6] sm:$0x3] %vm96, %v91
    %101 = vst.msk [vmem:[#allocation8 + $0x8] sm:$0x3] %vm96, %v92
    %102 = vst.msk [vmem:[#allocation8 + $0xa] sm:$0x3] %vm96, %v93
    %103 = vst.msk [vmem:[#allocation8 + $0xc] sm:$0x3] %vm96, %v94
    %104 = vst.msk [vmem:[#allocation8 + $0xe] sm:$0x3] %vm96, %v95
    // Predicated region
    $region22: #{tpu_custom_call.1} parent=1 // pred_check
      _
    $region23: #{tpu_custom_call.1} parent=1 // pred_check_branch
      %106 = sbr.rel (0) target = $region25
    $region24: #{tpu_custom_call.1} parent=1 // pred_region
      %108 = vsyncadd [#allocation5], 0
      %s109 = sshll.u32 [#allocation8], 4
      %s110 = int_to_ptr.vmem [resolvable:$true] %s109
      %s111 = sshll.u32 %s3, 4
      %s112 = int_to_ptr.hbm [resolvable:$true] %s111
      %117 = dma.vmem_to_hbm [thread:$0]  %s110, 256, %s112, [#allocation5], 32, 32, 2
    $region25: #{tpu_custom_call.1} parent=1 // pred_fallthru
      _
    // Predicated region
    $region26: #{tpu_custom_call.1} parent=1 // pred_check
      _
    $region27: #{tpu_custom_call.1} parent=1 // pred_check_branch
      %119 = sbr.rel (0) target = $region29
    $region28: #{tpu_custom_call.1} parent=1 // pred_region
      %121 = dma.done [#allocation5], 256
    $region29: #{tpu_custom_call.1} parent=1 // pred_fallthru
      _
    %122 = vsyncpa [#allocation4], 1
    %123 = vsyncpa [#allocation7], 1
    %124 = vsyncpa [#allocation5], 1

</llo_original>
